<compile_context>
chip_gen: v7x
topology: tpu7x:2x2x1
jax: 0.10.0
libtpu: 0.0.40
codegen_flags: <defaults>
</compile_context>

<pallas_src>
import functools
import math

import jax
import jax.numpy as jnp
from jax.experimental import pallas as pl
from jax.experimental.pallas import tpu as pltpu


_SQRT_HALF = 0.7071067811865476
_SQRT_2_OVER_PI = 0.7978845608028654


def _gelu_exact(x):
    # PyTorch nn.GELU() default = exact erf-based GELU (computed in f32).
    return 0.5 * x * (1.0 + jax.lax.erf(x * _SQRT_HALF))


def _gelu_tanh(x):
    # tanh approximation (EUP transcendental, ~1e-3 deviation from exact erf).
    return 0.5 * x * (1.0 + jnp.tanh(_SQRT_2_OVER_PI * (x + 0.044715 * x * x * x)))


def _round_up(n, m):
    return ((n + m - 1) // m) * m


def _pad2(a, rows, cols):
    pr, pc = rows - a.shape[0], cols - a.shape[1]
    if pr or pc:
        a = jnp.pad(a, ((0, pr), (0, pc)))
    return a


def _mlp_kernel(x_ref, w1_ref, b1_ref, w2_ref, b2_ref, w3_ref, b3_ref, o_ref,
                *, approx_gelu):
    gelu = _gelu_tanh if approx_gelu else _gelu_exact

    # Layer 1: [tm, Din_p] @ [Din_p, H1_p] on the MXU, f32 accumulation.
    h = jnp.dot(x_ref[...], w1_ref[...], preferred_element_type=jnp.float32)
    h = gelu(h + b1_ref[...])          # Dropout(0.1): identity in eval mode.

    # Layer 2 (cast activations back to the MXU feed dtype; no-op on f32 path).
    h = jnp.dot(h.astype(w2_ref.dtype), w2_ref[...],
                preferred_element_type=jnp.float32)
    h = gelu(h + b2_ref[...])          # Dropout(0.1): identity in eval mode.

    # Layer 3 (no activation).
    out = jnp.dot(h.astype(w3_ref.dtype), w3_ref[...],
                  preferred_element_type=jnp.float32)
    o_ref[...] = (out + b3_ref[...]).astype(o_ref.dtype)


def prepare_params(params, *, mxu_dtype=jnp.bfloat16):
    """One-time weight preparation (do this OUTSIDE the hot path).

    Pads every feature dim to a multiple of 128 (lane-dense MXU tiles; exact
    because padded weights/biases are zero and GELU(0) = 0) and casts the MXU
    operands once, so the per-call forward issues zero weight-side XLA ops.
    """
    w1, b1 = params["w1"], params["b1"]
    w2, b2 = params["w2"], params["b2"]
    w3, b3 = params["w3"], params["b3"]
    Din, H1 = w1.shape
    H2, Dout = w2.shape[1], w3.shape[1]
    Din_p, H1_p, H2_p, Dout_p = (_round_up(d, 128) for d in (Din, H1, H2, Dout))

    prepared = {
        "w1": _pad2(w1, Din_p, H1_p).astype(mxu_dtype),
        "b1": _pad2(b1, 1, H1_p).astype(jnp.float32),
        "w2": _pad2(w2, H1_p, H2_p).astype(mxu_dtype),
        "b2": _pad2(b2, 1, H2_p).astype(jnp.float32),
        "w3": _pad2(w3, H2_p, Dout_p).astype(mxu_dtype),
        "b3": _pad2(b3, 1, Dout_p).astype(jnp.float32),
        "dims": (Din, Dout, Din_p, H1_p, H2_p, Dout_p),
        "mxu_dtype": mxu_dtype,
    }
    # Materialize now so the pad/cast never runs per-forward.
    jax.block_until_ready([prepared[k] for k in ("w1", "b1", "w2", "b2", "w3", "b3")])
    return prepared


def _resident_spec(shape):
    # Full-extent block + constant index_map -> stays VMEM-resident across the
    # grid.  Single-buffered: the block never changes, so double-buffering it
    # only wastes VMEM and DMA bookkeeping.
    index_map = lambda i: (0,) * len(shape)
    try:
        return pl.BlockSpec(shape, index_map, pipeline_mode=pl.Buffered(1))
    except TypeError:  # older jax without pipeline_mode on BlockSpec
        return pl.BlockSpec(shape, index_map)


def modality_adapter_forward(x, prepared, *, out_dtype=jnp.float32,
                             approx_gelu=False, return_padded=False,
                             max_block_rows=512):
    """Fused ModalityAdapter forward (text modality, eval mode).

    x: [B, input_dim].
    prepared: output of prepare_params() (padded + pre-cast weights/biases).
    out_dtype: output dtype (bf16 halves HBM writeback if the consumer accepts it).
    approx_gelu: tanh-approx GELU behind a flag (~1e-3 deviation from exact erf).
    return_padded: return the [B_p, Dout_p] padded output so the consumer can
        fuse the slice instead of materializing it here.
    max_block_rows: cap on rows per grid step (multiple of 8).
    """
    Din, Dout, Din_p, H1_p, H2_p, Dout_p = prepared["dims"]
    mxu_dtype = prepared["mxu_dtype"]

    B = x.shape[0]
    assert x.shape[1] == Din, f"expected input_dim={Din}, got {x.shape[1]}"

    # Adaptive batch tiling:
    #  * minimal 8-row padding (no junk rows from a fixed 256-row tile),
    #  * >= 2 tiles once B >= 16 so the "parallel" axis uses both v7x TCs,
    #  * rows per tile capped at max_block_rows to bound VMEM.
    B8 = _round_up(B, 8)
    n_tiles = max(1, math.ceil(B8 / max_block_rows))
    if B8 >= 16:
        n_tiles = max(n_tiles, 2)
    tm = _round_up(math.ceil(B8 / n_tiles), 8)
    B_p = _round_up(B8, tm)
    n_tiles = B_p // tm

    # Activation pad + cast (the only per-call prep; weights are pre-prepared).
    x_p = _pad2(x, B_p, Din_p).astype(mxu_dtype)

    w1, b1 = prepared["w1"], prepared["b1"]
    w2, b2 = prepared["w2"], prepared["b2"]
    w3, b3 = prepared["w3"], prepared["b3"]

    def act_spec(cols):
        # Activation tiles march down the (padded) batch.
        return pl.BlockSpec((tm, cols), lambda i: (i, 0))

    mxu_bytes = jnp.dtype(mxu_dtype).itemsize
    out_bytes = jnp.dtype(out_dtype).itemsize
    weight_bytes = sum(int(a.size) * a.dtype.itemsize
                       for a in (w1, b1, w2, b2, w3, b3))

    # Tight VMEM budget (double-buffered activations, single-buffered weights,
    # f32 intermediates) with 2x headroom; leaves scoped-VMEM room for
    # neighbouring fusions, especially on v7x (64 MiB physical).
    vmem_bytes = (2 * tm * Din_p * mxu_bytes
                  + 2 * tm * Dout_p * out_bytes
                  + 2 * tm * max(H1_p, H2_p) * 4
                  + weight_bytes)
    vmem_limit = int(min(max(2 * vmem_bytes, 4 << 20), 64 << 20))

    cost = pl.CostEstimate(
        flops=2 * B_p * (Din_p * H1_p + H1_p * H2_p + H2_p * Dout_p),
        # erf lowers to a VALU polynomial (no EUP op); only the tanh-approx
        # path issues real transcendentals.
        transcendentals=(B_p * (H1_p + H2_p)) if approx_gelu else 0,
        bytes_accessed=int(x_p.size) * mxu_bytes + weight_bytes
                       + B_p * Dout_p * out_bytes,
    )

    out_p = pl.pallas_call(
        functools.partial(_mlp_kernel, approx_gelu=approx_gelu),
        out_shape=jax.ShapeDtypeStruct((B_p, Dout_p), out_dtype),
        grid_spec=pltpu.PrefetchScalarGridSpec(
            num_scalar_prefetch=0,
            grid=(n_tiles,),
            in_specs=[
                act_spec(Din_p),
                _resident_spec(w1.shape), _resident_spec(b1.shape),
                _resident_spec(w2.shape), _resident_spec(b2.shape),
                _resident_spec(w3.shape), _resident_spec(b3.shape),
            ],
            out_specs=act_spec(Dout_p),
        ),
        compiler_params=pltpu.CompilerParams(
            dimension_semantics=("parallel",),
            vmem_limit_bytes=vmem_limit,
        ),
        cost_estimate=cost,
    )(x_p, w1, b1, w2, b2, w3, b3)

    if return_padded:
        return out_p            # caller slices [:B, :Dout]; XLA can fuse it
    return out_p[:B, :Dout]


def init_params(key, input_dim, output_dim):
    """Deterministic synthetic parameters matching ModalityAdapter.__init__
    for modality='text' with default hidden_dims."""
    hidden_dims = [min(input_dim, output_dim) * 2, (input_dim + output_dim) // 2]
    dims = [input_dim] + hidden_dims + [output_dim]
    params = {}
    keys = jax.random.split(key, 2 * (len(dims) - 1))
    for i in range(len(dims) - 1):
        fan_in, fan_out = dims[i], dims[i + 1]
        scale = 1.0 / jnp.sqrt(jnp.float32(fan_in))
        w = jax.random.uniform(keys[2 * i], (fan_in, fan_out),
                               jnp.float32, -scale, scale)
        b = jax.random.uniform(keys[2 * i + 1], (1, fan_out),
                               jnp.float32, -scale, scale)
        params[f"w{i+1}"] = w
        params[f"b{i+1}"] = b
    return params


def reference_forward(x, params):
    h = _gelu_exact(x @ params["w1"] + params["b1"])
    h = _gelu_exact(h @ params["w2"] + params["b2"])
    return h @ params["w3"] + params["b3"]


if __name__ == "__main__":
    input_dim = 64
    output_dim = 300   # module default
    batch = 8

    key = jax.random.PRNGKey(0)
    kx, kp = jax.random.split(key)
    x = jax.random.normal(kx, (batch, input_dim), dtype=jnp.float32)
    params = init_params(kp, input_dim, output_dim)
    ref = reference_forward(x, params)

    # Exact path: f32 MXU operands, matches the PyTorch module at f32 precision.
    prep_f32 = prepare_params(params, mxu_dtype=jnp.float32)
    out_exact = jax.block_until_ready(modality_adapter_forward(x, prep_f32))
    assert out_exact.shape == (batch, output_dim)
    assert jnp.allclose(out_exact, ref, atol=1e-4, rtol=1e-4)

    # Fast path: bf16 MXU operands, f32 accumulation / bias / GELU.
    prep_bf16 = prepare_params(params, mxu_dtype=jnp.bfloat16)
    out_fast = jax.block_until_ready(modality_adapter_forward(x, prep_bf16))
    assert out_fast.shape == (batch, output_dim)
    assert jnp.allclose(out_fast, ref, atol=5e-2, rtol=5e-2)

    # tanh-approx GELU path (EUP transcendental; gated behind a flag).
    out_approx = jax.block_until_ready(
        modality_adapter_forward(x, prep_bf16, approx_gelu=True))
    assert jnp.allclose(out_approx, ref, atol=5e-2, rtol=5e-2)

    # Larger batch: adaptive tiling -> 2 x 152-row tiles (B_p=304, not 512),
    # "parallel" semantics shards them across both TensorCores on v7x; bf16
    # output exercises the reduced-HBM-writeback path.
    x_big = jax.random.normal(jax.random.PRNGKey(1), (300, input_dim),
                              dtype=jnp.float32)
    ref_big = reference_forward(x_big, params)
    out_big = jax.block_until_ready(
        modality_adapter_forward(x_big, prep_bf16, out_dtype=jnp.bfloat16))
    assert out_big.shape == (300, output_dim)
    assert jnp.allclose(out_big.astype(jnp.float32), ref_big,
                        atol=5e-2, rtol=5e-2)

    print("KERNEL_OK")
</pallas_src>

<mosaic_0001>
module attributes {stable_mosaic.version = 11 : i64} {
  func.func @_mlp_kernel(%arg0: i32, %arg1: memref<8x128xf32, #tpu.memory_space<vmem>>, %arg2: memref<128x128xf32, #tpu.memory_space<vmem>>, %arg3: memref<1x128xf32, #tpu.memory_space<vmem>>, %arg4: memref<128x256xf32, #tpu.memory_space<vmem>>, %arg5: memref<1x256xf32, #tpu.memory_space<vmem>>, %arg6: memref<256x384xf32, #tpu.memory_space<vmem>>, %arg7: memref<1x384xf32, #tpu.memory_space<vmem>>, %arg8: memref<8x384xf32, #tpu.memory_space<vmem>>) attributes {dimension_semantics = [#tpu.dimension_semantics<parallel>], iteration_bounds = array<i64: 1>, scalar_prefetch = 0 : i64, scratch_operands = 0 : i64, tpu.core_type = #tpu.core_type<tc>, window_params = [{transform_indices = @transform_0, window_bounds = array<i64: 8, 128>}, {pipeline_mode = #tpu.pipeline_mode<synchronous>, transform_indices = @transform_1, window_bounds = array<i64: 128, 128>}, {pipeline_mode = #tpu.pipeline_mode<synchronous>, transform_indices = @transform_2, window_bounds = array<i64: 1, 128>}, {pipeline_mode = #tpu.pipeline_mode<synchronous>, transform_indices = @transform_3, window_bounds = array<i64: 128, 256>}, {pipeline_mode = #tpu.pipeline_mode<synchronous>, transform_indices = @transform_4, window_bounds = array<i64: 1, 256>}, {pipeline_mode = #tpu.pipeline_mode<synchronous>, transform_indices = @transform_5, window_bounds = array<i64: 256, 384>}, {pipeline_mode = #tpu.pipeline_mode<synchronous>, transform_indices = @transform_6, window_bounds = array<i64: 1, 384>}, {transform_indices = @transform_7, window_bounds = array<i64: 8, 384>}]} {
    %c0 = arith.constant 0 : index
    %c0_0 = arith.constant 0 : index
    %0 = vector.load %arg1[%c0, %c0_0] : memref<8x128xf32, #tpu.memory_space<vmem>>, vector<8x128xf32>
    %c0_1 = arith.constant 0 : index
    %c0_2 = arith.constant 0 : index
    %1 = vector.load %arg2[%c0_1, %c0_2] : memref<128x128xf32, #tpu.memory_space<vmem>>, vector<128x128xf32>
    %cst = arith.constant dense<0.000000e+00> : vector<8x128xf32>
    %2 = tpu.matmul %0, %1, %cst {dimension_numbers = #tpu.dot_dimension_numbers<[1], [0], [0], [1], [0, 0, 1, 1], [], []>} : vector<8x128xf32>, vector<128x128xf32>, vector<8x128xf32> -> vector<8x128xf32>
    %c0_3 = arith.constant 0 : index
    %c0_4 = arith.constant 0 : index
    %3 = vector.load %arg3[%c0_3, %c0_4] : memref<1x128xf32, #tpu.memory_space<vmem>>, vector<1x128xf32>
    %4 = vector.broadcast %3 : vector<1x128xf32> to vector<8x128xf32>
    %5 = arith.addf %2, %4 : vector<8x128xf32>
    %cst_5 = arith.constant 5.000000e-01 : f32
    %6 = vector.broadcast %cst_5 : f32 to vector<8x128xf32>
    %7 = arith.mulf %6, %5 : vector<8x128xf32>
    %cst_6 = arith.constant 0.707106769 : f32
    %8 = vector.broadcast %cst_6 : f32 to vector<8x128xf32>
    %9 = arith.mulf %5, %8 : vector<8x128xf32>
    %10 = math.erf %9 : vector<8x128xf32>
    %cst_7 = arith.constant 1.000000e+00 : f32
    %11 = vector.broadcast %cst_7 : f32 to vector<8x128xf32>
    %12 = arith.addf %11, %10 : vector<8x128xf32>
    %13 = arith.mulf %7, %12 : vector<8x128xf32>
    %c0_8 = arith.constant 0 : index
    %c0_9 = arith.constant 0 : index
    %14 = vector.load %arg4[%c0_8, %c0_9] : memref<128x256xf32, #tpu.memory_space<vmem>>, vector<128x256xf32>
    %cst_10 = arith.constant dense<0.000000e+00> : vector<8x256xf32>
    %15 = tpu.matmul %13, %14, %cst_10 {dimension_numbers = #tpu.dot_dimension_numbers<[1], [0], [0], [1], [0, 0, 1, 1], [], []>} : vector<8x128xf32>, vector<128x256xf32>, vector<8x256xf32> -> vector<8x256xf32>
    %c0_11 = arith.constant 0 : index
    %c0_12 = arith.constant 0 : index
    %16 = vector.load %arg5[%c0_11, %c0_12] : memref<1x256xf32, #tpu.memory_space<vmem>>, vector<1x256xf32>
    %17 = vector.broadcast %16 : vector<1x256xf32> to vector<8x256xf32>
    %18 = arith.addf %15, %17 : vector<8x256xf32>
    %cst_13 = arith.constant 5.000000e-01 : f32
    %19 = vector.broadcast %cst_13 : f32 to vector<8x256xf32>
    %20 = arith.mulf %19, %18 : vector<8x256xf32>
    %cst_14 = arith.constant 0.707106769 : f32
    %21 = vector.broadcast %cst_14 : f32 to vector<8x256xf32>
    %22 = arith.mulf %18, %21 : vector<8x256xf32>
    %23 = math.erf %22 : vector<8x256xf32>
    %cst_15 = arith.constant 1.000000e+00 : f32
    %24 = vector.broadcast %cst_15 : f32 to vector<8x256xf32>
    %25 = arith.addf %24, %23 : vector<8x256xf32>
    %26 = arith.mulf %20, %25 : vector<8x256xf32>
    %c0_16 = arith.constant 0 : index
    %c0_17 = arith.constant 0 : index
    %27 = vector.load %arg6[%c0_16, %c0_17] : memref<256x384xf32, #tpu.memory_space<vmem>>, vector<256x384xf32>
    %cst_18 = arith.constant dense<0.000000e+00> : vector<8x384xf32>
    %28 = tpu.matmul %26, %27, %cst_18 {dimension_numbers = #tpu.dot_dimension_numbers<[1], [0], [0], [1], [0, 0, 1, 1], [], []>} : vector<8x256xf32>, vector<256x384xf32>, vector<8x384xf32> -> vector<8x384xf32>
    %c0_19 = arith.constant 0 : index
    %c0_20 = arith.constant 0 : index
    %29 = vector.load %arg7[%c0_19, %c0_20] : memref<1x384xf32, #tpu.memory_space<vmem>>, vector<1x384xf32>
    %30 = vector.broadcast %29 : vector<1x384xf32> to vector<8x384xf32>
    %31 = arith.addf %28, %30 : vector<8x384xf32>
    %c0_21 = arith.constant 0 : index
    %c0_22 = arith.constant 0 : index
    %32 = vector.load %arg8[%c0_21, %c0_22] : memref<8x384xf32, #tpu.memory_space<vmem>>, vector<8x384xf32>
    tpu.vector_store %arg8[%c0_21, %c0_22], %31 {strides = array<i32>} : memref<8x384xf32, #tpu.memory_space<vmem>>, vector<8x384xf32>,
    return
  }
  func.func @transform_0(%arg0: i32) -> (i32, i32) {
    %c0_i32 = arith.constant 0 : i32
    %c0_i32_0 = arith.constant 0 : i32
    return %arg0, %c0_i32 : i32, i32
  }
  func.func @transform_1(%arg0: i32) -> (i32, i32) {
    %c0_i32 = arith.constant 0 : i32
    %c0_i32_0 = arith.constant 0 : i32
    %c0_i32_1 = arith.constant 0 : i32
    return %c0_i32, %c0_i32_0 : i32, i32
  }
  func.func @transform_2(%arg0: i32) -> (i32, i32) {
    %c0_i32 = arith.constant 0 : i32
    %c0_i32_0 = arith.constant 0 : i32
    %c0_i32_1 = arith.constant 0 : i32
    return %c0_i32, %c0_i32_0 : i32, i32
  }
  func.func @transform_3(%arg0: i32) -> (i32, i32) {
    %c0_i32 = arith.constant 0 : i32
    %c0_i32_0 = arith.constant 0 : i32
    %c0_i32_1 = arith.constant 0 : i32
    return %c0_i32, %c0_i32_0 : i32, i32
  }
  func.func @transform_4(%arg0: i32) -> (i32, i32) {
    %c0_i32 = arith.constant 0 : i32
    %c0_i32_0 = arith.constant 0 : i32
    %c0_i32_1 = arith.constant 0 : i32
    return %c0_i32, %c0_i32_0 : i32, i32
  }
  func.func @transform_5(%arg0: i32) -> (i32, i32) {
    %c0_i32 = arith.constant 0 : i32
    %c0_i32_0 = arith.constant 0 : i32
    %c0_i32_1 = arith.constant 0 : i32
    return %c0_i32, %c0_i32_0 : i32, i32
  }
  func.func @transform_6(%arg0: i32) -> (i32, i32) {
    %c0_i32 = arith.constant 0 : i32
    %c0_i32_0 = arith.constant 0 : i32
    %c0_i32_1 = arith.constant 0 : i32
    return %c0_i32, %c0_i32_0 : i32, i32
  }
  func.func @transform_7(%arg0: i32) -> (i32, i32) {
    %c0_i32 = arith.constant 0 : i32
    %c0_i32_0 = arith.constant 0 : i32
    return %arg0, %c0_i32 : i32, i32
  }
}

</mosaic_0001>

<llo_original>
// kernel: tpu_custom_call.1
$region0: #{tpu_custom_call.1}
  #allocation0 [shape = 'u32[]', space=smem, size = 0x4, offset = 0x4, fixed_abs, tag = 'smem constant byte address 0x4 - core index']
  #allocation1 [shape = 'u32[144,128]{1,0:T(1,128)}', space=vmem, size = 0x12000, scoped, tag = 'internal scratch']
  %s0 = inlined_call_operand.hbm [shape: f32[8,128], index: 0, kind: input, shape index: {}]
  %s1 = inlined_call_operand.hbm [shape: f32[128,128], index: 1, kind: input, shape index: {}]
  %s2 = inlined_call_operand.vmem [shape: f32[1,128], index: 2, kind: input, shape index: {}]
  %s3 = inlined_call_operand.hbm [shape: f32[128,256], index: 3, kind: input, shape index: {}]
  %s4 = inlined_call_operand.vmem [shape: f32[1,256], index: 4, kind: input, shape index: {}]
  %s5 = inlined_call_operand.hbm [shape: f32[256,384], index: 5, kind: input, shape index: {}]
  %s6 = inlined_call_operand.vmem [shape: f32[1,384], index: 6, kind: input, shape index: {}]
  %s7 = inlined_call_operand.hbm [shape: f32[8,384], index: 7, kind: output, shape index: {}]
  %s8 = sld [smem:[#allocation0]]
  $region54: #{tpu_custom_call.1} parent=0
    _
  %s10 = ssub.s32 1, %s8
  %s11 = scalar_select 0, %s10, %s8
  $region1: #{tpu_custom_call.1} parent=0
    #allocation2 [shape = 'u8[4096]{0}', space=vmem, size = 0x1000, scoped, tag = 'input window, operand 0, single buffered']
    #allocation3 [shape = 's32[1]{0}', space=sflag, size = 0x4, scoped, tag = 'scoped memory for tpu_custom_call.1']
    #allocation4 [shape = 's32[1]{0}', space=sflag, size = 0x4, scoped, tag = 'scoped memory for tpu_custom_call.1']
    #allocation5 [shape = 'u8[65536]{0}', space=vmem, size = 0x10000, scoped, tag = 'input window, operand 1, single buffered']
    #allocation6 [shape = 's32[1]{0}', space=sflag, size = 0x4, scoped, tag = 'scoped memory for tpu_custom_call.1']
    #allocation7 [shape = 'u8[131072]{0}', space=vmem, size = 0x20000, scoped, tag = 'input window, operand 3, single buffered']
    #allocation8 [shape = 'u8[393216]{0}', space=vmem, size = 0x60000, scoped, tag = 'input window, operand 5, single buffered']
    #allocation9 [shape = 's32[1]{0}', space=sflag, size = 0x4, scoped, tag = 'scoped memory for tpu_custom_call.1']
    #allocation10 [shape = 'u8[12288]{0}', space=vmem, size = 0x3000, scoped, tag = 'output window, operand 0, single buffered']
    %12 = vsyncpa [#allocation3], 0
    %13 = vsyncpa [#allocation6], 0
    %14 = vsyncpa [#allocation9], 0
    %15 = vsyncpa [#allocation4], 0
    // Predicated region
    $region2: #{tpu_custom_call.1} parent=1 // pred_check
      _
    $region3: #{tpu_custom_call.1} parent=1 // pred_check_branch
      %17 = sbr.rel (0) target = $region5
    $region4: #{tpu_custom_call.1} parent=1 // pred_region
      %s19 = ssub.s32 128, 128
      %20 = vsyncadd [#allocation3], %s19
      %s22 = sshll.u32 [#allocation2], 4
      %s23 = int_to_ptr.vmem [resolvable:$true] %s22
      %25 = dma.hbm_to_vmem [thread:$0]  %s0, 128, %s23, [#allocation3]
    $region5: #{tpu_custom_call.1} parent=1 // pred_fallthru
      _
    // Predicated region
    $region6: #{tpu_custom_call.1} parent=1 // pred_check
      _
    $region7: #{tpu_custom_call.1} parent=1 // pred_check_branch
      %27 = sbr.rel (0) target = $region9
    $region8: #{tpu_custom_call.1} parent=1 // pred_region
      %s29 = ssub.s32 2048, 2048
      %30 = vsyncadd [#allocation6], %s29
      %s31 = sshll.u32 [#allocation5], 4
      %s32 = int_to_ptr.vmem [resolvable:$true] %s31
      %37 = dma.hbm_to_vmem [thread:$0]  %s1, 2048, %s32, [#allocation6], 128, 128, 8
    $region9: #{tpu_custom_call.1} parent=1 // pred_fallthru
      _
    // Predicated region
    $region10: #{tpu_custom_call.1} parent=1 // pred_check
      _
    $region11: #{tpu_custom_call.1} parent=1 // pred_check_branch
      %39 = sbr.rel (0) target = $region13
    $region12: #{tpu_custom_call.1} parent=1 // pred_region
      _
    $region13: #{tpu_custom_call.1} parent=1 // pred_fallthru
      _
    // Predicated region
    $region14: #{tpu_custom_call.1} parent=1 // pred_check
      _
    $region15: #{tpu_custom_call.1} parent=1 // pred_check_branch
      %41 = sbr.rel (0) target = $region17
    $region16: #{tpu_custom_call.1} parent=1 // pred_region
      %s43 = ssub.s32 4096, 4096
      %44 = vsyncadd [#allocation6], %s43
      %s45 = sshll.u32 [#allocation7], 4
      %s46 = int_to_ptr.vmem [resolvable:$true] %s45
      %51 = dma.hbm_to_vmem [thread:$0]  %s3, 4096, %s46, [#allocation6], 256, 256, 16
    $region17: #{tpu_custom_call.1} parent=1 // pred_fallthru
      _
    // Predicated region
    $region18: #{tpu_custom_call.1} parent=1 // pred_check
      _
    $region19: #{tpu_custom_call.1} parent=1 // pred_check_branch
      %53 = sbr.rel (0) target = $region21
    $region20: #{tpu_custom_call.1} parent=1 // pred_region
      _
    $region21: #{tpu_custom_call.1} parent=1 // pred_fallthru
      _
    // Predicated region
    $region22: #{tpu_custom_call.1} parent=1 // pred_check
      _
    $region23: #{tpu_custom_call.1} parent=1 // pred_check_branch
      %55 = sbr.rel (0) target = $region25
    $region24: #{tpu_custom_call.1} parent=1 // pred_region
      %s57 = ssub.s32 12288, 12288
      %58 = vsyncadd [#allocation9], %s57
      %s59 = sshll.u32 [#allocation8], 4
      %s60 = int_to_ptr.vmem [resolvable:$true] %s59
      %65 = dma.hbm_to_vmem [thread:$0]  %s5, 12288, %s60, [#allocation9], 384, 384, 24
    $region25: #{tpu_custom_call.1} parent=1 // pred_fallthru
      _
    // Predicated region
    $region26: #{tpu_custom_call.1} parent=1 // pred_check
      _
    $region27: #{tpu_custom_call.1} parent=1 // pred_check_branch
      %67 = sbr.rel (0) target = $region29
    $region28: #{tpu_custom_call.1} parent=1 // pred_region
      _
    $region29: #{tpu_custom_call.1} parent=1 // pred_fallthru
      _
    // Predicated region
    $region30: #{tpu_custom_call.1} parent=1 // pred_check
      _
    $region31: #{tpu_custom_call.1} parent=1 // pred_check_branch
      %69 = sbr.rel (0) target = $region33
    $region32: #{tpu_custom_call.1} parent=1 // pred_region
      %70 = dma.done [#allocation3], 128
    $region33: #{tpu_custom_call.1} parent=1 // pred_fallthru
      _
    // Predicated region
    $region34: #{tpu_custom_call.1} parent=1 // pred_check
      _
    $region35: #{tpu_custom_call.1} parent=1 // pred_check_branch
      %72 = sbr.rel (0) target = $region37
    $region36: #{tpu_custom_call.1} parent=1 // pred_region
      %73 = dma.done [#allocation6], 2048
    $region37: #{tpu_custom_call.1} parent=1 // pred_fallthru
      _
    // Predicated region
    $region38: #{tpu_custom_call.1} parent=1 // pred_check
      _
    $region39: #{tpu_custom_call.1} parent=1 // pred_check_branch
      %75 = sbr.rel (0) target = $region41
    $region40: #{tpu_custom_call.1} parent=1 // pred_region
      %76 = dma.done [#allocation6], 4096
    $region41: #{tpu_custom_call.1} parent=1 // pred_fallthru
      _
    // Predicated region
    $region42: #{tpu_custom_call.1} parent=1 // pred_check
      _
    $region43: #{tpu_custom_call.1} parent=1 // pred_check_branch
      %78 = sbr.rel (0) target = $region45
    $region44: #{tpu_custom_call.1} parent=1 // pred_region
      %79 = dma.done [#allocation9], 12288
    $region45: #{tpu_custom_call.1} parent=1 // pred_fallthru
      _
    %v80 = vld [vmem:[#allocation2] sm:$0xff]
    %v81 = vld [vmem:[#allocation5] sm:$0xff]
    %v82 = vld [vmem:[#allocation5 + $0x8] sm:$0xff]
    %v83 = vld [vmem:[#allocation5 + $0x10] sm:$0xff]
    %v84 = vld [vmem:[#allocation5 + $0x18] sm:$0xff]
    %v85 = vld [vmem:[#allocation5 + $0x20] sm:$0xff]
    %v86 = vld [vmem:[#allocation5 + $0x28] sm:$0xff]
    %v87 = vld [vmem:[#allocation5 + $0x30] sm:$0xff]
    %v88 = vld [vmem:[#allocation5 + $0x38] sm:$0xff]
    %v89 = vld [vmem:[#allocation5 + $0x40] sm:$0xff]
    %v90 = vld [vmem:[#allocation5 + $0x48] sm:$0xff]
    %v91 = vld [vmem:[#allocation5 + $0x50] sm:$0xff]
    %v92 = vld [vmem:[#allocation5 + $0x58] sm:$0xff]
    %v93 = vld [vmem:[#allocation5 + $0x60] sm:$0xff]
    %v94 = vld [vmem:[#allocation5 + $0x68] sm:$0xff]
    %v95 = vld [vmem:[#allocation5 + $0x70] sm:$0xff]
    %v96 = vld [vmem:[#allocation5 + $0x78] sm:$0xff]
    %v97 = vld [vmem:[%s2] sm:$0x1]
    %v99 = vlaneseq
    %v100 = vshrl.u32 %v99, 7
    %v101 = vsub.s32 0, %v100
    %v102 = vrot.slane %v97, %v101
    %104 = vmatprep.subr.mxu0 0.0
    %105 = vmatpush1.msra.mxu0 %v81
    %106 = vmatprep.subr.mxu0 0.0
    %107 = vmatpush1.msra.mxu0 %v82
    %108 = vmatprep.subr.mxu0 0.0
    %109 = vmatpush1.msra.mxu0 %v83
    %110 = vmatprep.subr.mxu0 0.0
    %111 = vmatpush1.msra.mxu0 %v84
    %112 = vmatprep.subr.mxu0 0.0
    %113 = vmatpush1.msra.mxu0 %v85
    %114 = vmatprep.subr.mxu0 0.0
    %115 = vmatpush1.msra.mxu0 %v86
    %116 = vmatprep.subr.mxu0 0.0
    %117 = vmatpush1.msra.mxu0 %v87
    %118 = vmatprep.subr.mxu0 0.0
    %119 = vmatpush1.msra.mxu0 %v88
    %120 = vmatprep.subr.mxu0 0.0
    %121 = vmatpush1.msra.mxu0 %v89
    %122 = vmatprep.subr.mxu0 0.0
    %123 = vmatpush1.msra.mxu0 %v90
    %124 = vmatprep.subr.mxu0 0.0
    %125 = vmatpush1.msra.mxu0 %v91
    %126 = vmatprep.subr.mxu0 0.0
    %127 = vmatpush1.msra.mxu0 %v92
    %128 = vmatprep.subr.mxu0 0.0
    %129 = vmatpush1.msra.mxu0 %v93
    %130 = vmatprep.subr.mxu0 0.0
    %131 = vmatpush1.msra.mxu0 %v94
    %132 = vmatprep.subr.mxu0 0.0
    %133 = vmatpush1.msra.mxu0 %v95
    %134 = vmatprep.subr.mxu0 0.0
    %135 = vmatpush1.msra.mxu0 %v96
    %136 = vmatprep.subr.mxu0 0.0
    %137 = vmatpush1.msra.mxu0 0.0
    %138 = vmatprep.subr.mxu0 0.0
    %139 = vmatpush1.msra.mxu0 0.0
    %140 = vmatprep.subr.mxu0 0.0
    %141 = vmatpush1.msra.mxu0 0.0
    %142 = vmatprep.subr.mxu0 0.0
    %143 = vmatpush1.msra.mxu0 0.0
    %144 = vmatprep.subr.mxu0 0.0
    %145 = vmatpush1.msra.mxu0 0.0
    %146 = vmatprep.subr.mxu0 0.0
    %147 = vmatpush1.msra.mxu0 0.0
    %148 = vmatprep.subr.mxu0 0.0
    %149 = vmatpush1.msra.mxu0 0.0
    %150 = vmatprep.subr.mxu0 0.0
    %151 = vmatpush1.msra.mxu0 0.0
    %152 = vmatprep.subr.mxu0 0.0
    %153 = vmatpush1.msra.mxu0 0.0
    %154 = vmatprep.subr.mxu0 0.0
    %155 = vmatpush1.msra.mxu0 0.0
    %156 = vmatprep.subr.mxu0 0.0
    %157 = vmatpush1.msra.mxu0 0.0
    %158 = vmatprep.subr.mxu0 0.0
    %159 = vmatpush1.msra.mxu0 0.0
    %160 = vmatprep.subr.mxu0 0.0
    %161 = vmatpush1.msra.mxu0 0.0
    %162 = vmatprep.subr.mxu0 0.0
    %163 = vmatpush1.msra.mxu0 0.0
    %164 = vmatprep.subr.mxu0 0.0
    %165 = vmatpush1.msra.mxu0 0.0
    %166 = vmatprep.subr.mxu0 0.0
    %167 = vmatpush1.msra.mxu0 0.0
    %168 = vmatprep.mubr.f32.mxu0 0.0
    %169 = vmatmul.mubr.f32.gmra.mrb[0].mxu0 %v80
    %v170 = vpop.f32.mrb[0].mxu0
    %v171 = vadd.f32 %v102, %v170
    %v172 = vpop.f32.mrb[0].mxu0
    %173 = vdwg.mxu0
    %v174 = vmul.f32 %v171, 0.5
    %v175 = vmul.f32 %v171, 0.70710677
    %v176 = verf.f32.pop %v175
    %v177 = vadd.f32 %v176, 1.0
    %v178 = vmul.f32 %v174, %v177
    %v179 = vld [vmem:[#allocation7] sm:$0xff]
    %v180 = vld [vmem:[#allocation7 + $0x8] sm:$0xff]
    %v181 = vld [vmem:[#allocation7 + $0x10] sm:$0xff]
    %v182 = vld [vmem:[#allocation7 + $0x18] sm:$0xff]
    %v183 = vld [vmem:[#allocation7 + $0x20] sm:$0xff]
    %v184 = vld [vmem:[#allocation7 + $0x28] sm:$0xff]
    %v185 = vld [vmem:[#allocation7 + $0x30] sm:$0xff]
    %v186 = vld [vmem:[#allocation7 + $0x38] sm:$0xff]
    %v187 = vld [vmem:[#allocation7 + $0x40] sm:$0xff]
    %v188 = vld [vmem:[#allocation7 + $0x48] sm:$0xff]
    %v189 = vld [vmem:[#allocation7 + $0x50] sm:$0xff]
    %v190 = vld [vmem:[#allocation7 + $0x58] sm:$0xff]
    %v191 = vld [vmem:[#allocation7 + $0x60] sm:$0xff]
    %v192 = vld [vmem:[#allocation7 + $0x68] sm:$0xff]
    %v193 = vld [vmem:[#allocation7 + $0x70] sm:$0xff]
    %v194 = vld [vmem:[#allocation7 + $0x78] sm:$0xff]
    %v195 = vld [vmem:[#allocation7 + $0x80] sm:$0xff]
    %v196 = vld [vmem:[#allocation7 + $0x88] sm:$0xff]
    %v197 = vld [vmem:[#allocation7 + $0x90] sm:$0xff]
    %v198 = vld [vmem:[#allocation7 + $0x98] sm:$0xff]
    %v199 = vld [vmem:[#allocation7 + $0xa0] sm:$0xff]
    %v200 = vld [vmem:[#allocation7 + $0xa8] sm:$0xff]
    %v201 = vld [vmem:[#allocation7 + $0xb0] sm:$0xff]
    %v202 = vld [vmem:[#allocation7 + $0xb8] sm:$0xff]
    %v203 = vld [vmem:[#allocation7 + $0xc0] sm:$0xff]
    %v204 = vld [vmem:[#allocation7 + $0xc8] sm:$0xff]
    %v205 = vld [vmem:[#allocation7 + $0xd0] sm:$0xff]
    %v206 = vld [vmem:[#allocation7 + $0xd8] sm:$0xff]
    %v207 = vld [vmem:[#allocation7 + $0xe0] sm:$0xff]
    %v208 = vld [vmem:[#allocation7 + $0xe8] sm:$0xff]
    %v209 = vld [vmem:[#allocation7 + $0xf0] sm:$0xff]
    %v210 = vld [vmem:[#allocation7 + $0xf8] sm:$0xff]
    %v211 = vld [vmem:[%s4] sm:$0x3]
    %v213 = vlaneseq
    %v214 = vshrl.u32 %v213, 7
    %v215 = vsub.s32 0, %v214
    %v216 = vrot.slane %v211, %v215
    %v217 = vlaneseq
    %v218 = vshrl.u32 %v217, 7
    %v219 = vsub.s32 1, %v218
    %v220 = vrot.slane %v211, %v219
    %223 = vmatprep.subr.mxu0 %v180
    %224 = vmatpush1.msra.mxu0 %v179
    %225 = vmatprep.subr.mxu0 %v182
    %226 = vmatpush1.msra.mxu0 %v181
    %227 = vmatprep.subr.mxu0 %v184
    %228 = vmatpush1.msra.mxu0 %v183
    %229 = vmatprep.subr.mxu0 %v186
    %230 = vmatpush1.msra.mxu0 %v185
    %231 = vmatprep.subr.mxu0 %v188
    %232 = vmatpush1.msra.mxu0 %v187
    %233 = vmatprep.subr.mxu0 %v190
    %234 = vmatpush1.msra.mxu0 %v189
    %235 = vmatprep.subr.mxu0 %v192
    %236 = vmatpush1.msra.mxu0 %v191
    %237 = vmatprep.subr.mxu0 %v194
    %238 = vmatpush1.msra.mxu0 %v193
    %239 = vmatprep.subr.mxu0 %v196
    %240 = vmatpush1.msra.mxu0 %v195
    %241 = vmatprep.subr.mxu0 %v198
    %242 = vmatpush1.msra.mxu0 %v197
    %243 = vmatprep.subr.mxu0 %v200
    %244 = vmatpush1.msra.mxu0 %v199
    %245 = vmatprep.subr.mxu0 %v202
    %246 = vmatpush1.msra.mxu0 %v201
    %247 = vmatprep.subr.mxu0 %v204
    %248 = vmatpush1.msra.mxu0 %v203
    %249 = vmatprep.subr.mxu0 %v206
    %250 = vmatpush1.msra.mxu0 %v205
    %251 = vmatprep.subr.mxu0 %v208
    %252 = vmatpush1.msra.mxu0 %v207
    %253 = vmatprep.subr.mxu0 %v210
    %254 = vmatpush1.msra.mxu0 %v209
    %255 = vmatprep.subr.mxu0 0.0
    %256 = vmatpush1.msra.mxu0 0.0
    %257 = vmatprep.subr.mxu0 0.0
    %258 = vmatpush1.msra.mxu0 0.0
    %259 = vmatprep.subr.mxu0 0.0
    %260 = vmatpush1.msra.mxu0 0.0
    %261 = vmatprep.subr.mxu0 0.0
    %262 = vmatpush1.msra.mxu0 0.0
    %263 = vmatprep.subr.mxu0 0.0
    %264 = vmatpush1.msra.mxu0 0.0
    %265 = vmatprep.subr.mxu0 0.0
    %266 = vmatpush1.msra.mxu0 0.0
    %267 = vmatprep.subr.mxu0 0.0
    %268 = vmatpush1.msra.mxu0 0.0
    %269 = vmatprep.subr.mxu0 0.0
    %270 = vmatpush1.msra.mxu0 0.0
    %271 = vmatprep.subr.mxu0 0.0
    %272 = vmatpush1.msra.mxu0 0.0
    %273 = vmatprep.subr.mxu0 0.0
    %274 = vmatpush1.msra.mxu0 0.0
    %275 = vmatprep.subr.mxu0 0.0
    %276 = vmatpush1.msra.mxu0 0.0
    %277 = vmatprep.subr.mxu0 0.0
    %278 = vmatpush1.msra.mxu0 0.0
    %279 = vmatprep.subr.mxu0 0.0
    %280 = vmatpush1.msra.mxu0 0.0
    %281 = vmatprep.subr.mxu0 0.0
    %282 = vmatpush1.msra.mxu0 0.0
    %283 = vmatprep.subr.mxu0 0.0
    %284 = vmatpush1.msra.mxu0 0.0
    %285 = vmatprep.subr.mxu0 0.0
    %286 = vmatpush1.msra.mxu0 0.0
    %287 = vmatprep.mubr.f32.mxu0 0.0
    %288 = vmatmul.mubr.f32.gmra.mrb[0].mxu0 %v178
    %v289 = vpop.f32.mrb[0].mxu0
    %v290 = vadd.f32 %v216, %v289
    %v291 = vpop.f32.mrb[0].mxu0
    %v292 = vadd.f32 %v220, %v291
    %293 = vdwg.mxu0
    %v294 = vmul.f32 %v290, 0.5
    %v295 = vmul.f32 %v292, 0.5
    %v296 = vmul.f32 %v290, 0.70710677
    %v297 = vmul.f32 %v292, 0.70710677
    %v298 = verf.f32.pop %v296
    %v299 = verf.f32.pop %v297
    %v300 = vadd.f32 %v298, 1.0
    %v301 = vadd.f32 %v299, 1.0
    %v302 = vmul.f32 %v294, %v300
    %v303 = vmul.f32 %v295, %v301
    %v304 = vld [vmem:[#allocation8] sm:$0xff]
    %v305 = vld [vmem:[#allocation8 + $0x8] sm:$0xff]
    %v306 = vld [vmem:[#allocation8 + $0x10] sm:$0xff]
    %v307 = vld [vmem:[#allocation8 + $0x18] sm:$0xff]
    %v308 = vld [vmem:[#allocation8 + $0x20] sm:$0xff]
    %v309 = vld [vmem:[#allocation8 + $0x28] sm:$0xff]
    %v310 = vld [vmem:[#allocation8 + $0x30] sm:$0xff]
    %v311 = vld [vmem:[#allocation8 + $0x38] sm:$0xff]
    %v312 = vld [vmem:[#allocation8 + $0x40] sm:$0xff]
    %v313 = vld [vmem:[#allocation8 + $0x48] sm:$0xff]
    %v314 = vld [vmem:[#allocation8 + $0x50] sm:$0xff]
    %v315 = vld [vmem:[#allocation8 + $0x58] sm:$0xff]
    %v316 = vld [vmem:[#allocation8 + $0x60] sm:$0xff]
    %v317 = vld [vmem:[#allocation8 + $0x68] sm:$0xff]
    %v318 = vld [vmem:[#allocation8 + $0x70] sm:$0xff]
    %v319 = vld [vmem:[#allocation8 + $0x78] sm:$0xff]
    %v320 = vld [vmem:[#allocation8 + $0x80] sm:$0xff]
    %v321 = vld [vmem:[#allocation8 + $0x88] sm:$0xff]
    %v322 = vld [vmem:[#allocation8 + $0x90] sm:$0xff]
    %v323 = vld [vmem:[#allocation8 + $0x98] sm:$0xff]
    %v324 = vld [vmem:[#allocation8 + $0xa0] sm:$0xff]
    %v325 = vld [vmem:[#allocation8 + $0xa8] sm:$0xff]
    %v326 = vld [vmem:[#allocation8 + $0xb0] sm:$0xff]
    %v327 = vld [vmem:[#allocation8 + $0xb8] sm:$0xff]
    %v328 = vld [vmem:[#allocation8 + $0xc0] sm:$0xff]
    %v329 = vld [vmem:[#allocation8 + $0xc8] sm:$0xff]
    %v330 = vld [vmem:[#allocation8 + $0xd0] sm:$0xff]
    %v331 = vld [vmem:[#allocation8 + $0xd8] sm:$0xff]
    %v332 = vld [vmem:[#allocation8 + $0xe0] sm:$0xff]
    %v333 = vld [vmem:[#allocation8 + $0xe8] sm:$0xff]
    %v334 = vld [vmem:[#allocation8 + $0xf0] sm:$0xff]
    %v335 = vld [vmem:[#allocation8 + $0xf8] sm:$0xff]
    %v336 = vld [vmem:[#allocation8 + $0x100] sm:$0xff]
    %v337 = vld [vmem:[#allocation8 + $0x108] sm:$0xff]
    %v338 = vld [vmem:[#allocation8 + $0x110] sm:$0xff]
    %v339 = vld [vmem:[#allocation8 + $0x118] sm:$0xff]
    %v340 = vld [vmem:[#allocation8 + $0x120] sm:$0xff]
    %v341 = vld [vmem:[#allocation8 + $0x128] sm:$0xff]
    %v342 = vld [vmem:[#allocation8 + $0x130] sm:$0xff]
    %v343 = vld [vmem:[#allocation8 + $0x138] sm:$0xff]
    %v344 = vld [vmem:[#allocation8 + $0x140] sm:$0xff]
    %v345 = vld [vmem:[#allocation8 + $0x148] sm:$0xff]
    %v346 = vld [vmem:[#allocation8 + $0x150] sm:$0xff]
    %v347 = vld [vmem:[#allocation8 + $0x158] sm:$0xff]
    %v348 = vld [vmem:[#allocation8 + $0x160] sm:$0xff]
    %v349 = vld [vmem:[#allocation8 + $0x168] sm:$0xff]
    %v350 = vld [vmem:[#allocation8 + $0x170] sm:$0xff]
    %v351 = vld [vmem:[#allocation8 + $0x178] sm:$0xff]
    %v352 = vld [vmem:[#allocation8 + $0x180] sm:$0xff]
    %v353 = vld [vmem:[#allocation8 + $0x188] sm:$0xff]
    %v354 = vld [vmem:[#allocation8 + $0x190] sm:$0xff]
    %v355 = vld [vmem:[#allocation8 + $0x198] sm:$0xff]
    %v356 = vld [vmem:[#allocation8 + $0x1a0] sm:$0xff]
    %v357 = vld [vmem:[#allocation8 + $0x1a8] sm:$0xff]
    %v358 = vld [vmem:[#allocation8 + $0x1b0] sm:$0xff]
    %v359 = vld [vmem:[#allocation8 + $0x1b8] sm:$0xff]
    %v360 = vld [vmem:[#allocation8 + $0x1c0] sm:$0xff]
    %v361 = vld [vmem:[#allocation8 + $0x1c8] sm:$0xff]
    %v362 = vld [vmem:[#allocation8 + $0x1d0] sm:$0xff]
    %v363 = vld [vmem:[#allocation8 + $0x1d8] sm:$0xff]
    %v364 = vld [vmem:[#allocation8 + $0x1e0] sm:$0xff]
    %v365 = vld [vmem:[#allocation8 + $0x1e8] sm:$0xff]
    %v366 = vld [vmem:[#allocation8 + $0x1f0] sm:$0xff]
    %v367 = vld [vmem:[#allocation8 + $0x1f8] sm:$0xff]
    %v368 = vld [vmem:[#allocation8 + $0x200] sm:$0xff]
    %v369 = vld [vmem:[#allocation8 + $0x208] sm:$0xff]
    %v370 = vld [vmem:[#allocation8 + $0x210] sm:$0xff]
    %v371 = vld [vmem:[#allocation8 + $0x218] sm:$0xff]
    %v372 = vld [vmem:[#allocation8 + $0x220] sm:$0xff]
    %v373 = vld [vmem:[#allocation8 + $0x228] sm:$0xff]
    %v374 = vld [vmem:[#allocation8 + $0x230] sm:$0xff]
    %v375 = vld [vmem:[#allocation8 + $0x238] sm:$0xff]
    %v376 = vld [vmem:[#allocation8 + $0x240] sm:$0xff]
    %v377 = vld [vmem:[#allocation8 + $0x248] sm:$0xff]
    %v378 = vld [vmem:[#allocation8 + $0x250] sm:$0xff]
    %v379 = vld [vmem:[#allocation8 + $0x258] sm:$0xff]
    %v380 = vld [vmem:[#allocation8 + $0x260] sm:$0xff]
    %v381 = vld [vmem:[#allocation8 + $0x268] sm:$0xff]
    %v382 = vld [vmem:[#allocation8 + $0x270] sm:$0xff]
    %v383 = vld [vmem:[#allocation8 + $0x278] sm:$0xff]
    %v384 = vld [vmem:[#allocation8 + $0x280] sm:$0xff]
    %v385 = vld [vmem:[#allocation8 + $0x288] sm:$0xff]
    %v386 = vld [vmem:[#allocation8 + $0x290] sm:$0xff]
    %v387 = vld [vmem:[#allocation8 + $0x298] sm:$0xff]
    %v388 = vld [vmem:[#allocation8 + $0x2a0] sm:$0xff]
    %v389 = vld [vmem:[#allocation8 + $0x2a8] sm:$0xff]
    %v390 = vld [vmem:[#allocation8 + $0x2b0] sm:$0xff]
    %v391 = vld [vmem:[#allocation8 + $0x2b8] sm:$0xff]
    %v392 = vld [vmem:[#allocation8 + $0x2c0] sm:$0xff]
    %v393 = vld [vmem:[#allocation8 + $0x2c8] sm:$0xff]
    %v394 = vld [vmem:[#allocation8 + $0x2d0] sm:$0xff]
    %v395 = vld [vmem:[#allocation8 + $0x2d8] sm:$0xff]
    %v396 = vld [vmem:[#allocation8 + $0x2e0] sm:$0xff]
    %v397 = vld [vmem:[#allocation8 + $0x2e8] sm:$0xff]
    %v398 = vld [vmem:[#allocation8 + $0x2f0] sm:$0xff]
    %v399 = vld [vmem:[#allocation8 + $0x2f8] sm:$0xff]
    %v400 = vld [vmem:[%s6] sm:$0x7]
    %v402 = vlaneseq
    %v403 = vshrl.u32 %v402, 7
    %v404 = vsub.s32 0, %v403
    %v405 = vrot.slane %v400, %v404
    %v406 = vlaneseq
    %v407 = vshrl.u32 %v406, 7
    %v408 = vsub.s32 1, %v407
    %v409 = vrot.slane %v400, %v408
    %v410 = vlaneseq
    %v411 = vshrl.u32 %v410, 7
    %v412 = vsub.s32 2, %v411
    %v413 = vrot.slane %v400, %v412
    %417 = vmatprep.subr.mxu0 %v305
    %418 = vmatpush1.msra.mxu0 %v304
    %419 = vmatprep.subr.mxu0 %v308
    %420 = vmatpush1.msra.mxu0 %v307
    %421 = vmatprep.subr.mxu0 %v311
    %422 = vmatpush1.msra.mxu0 %v310
    %423 = vmatprep.subr.mxu0 %v314
    %424 = vmatpush1.msra.mxu0 %v313
    %425 = vmatprep.subr.mxu0 %v317
    %426 = vmatpush1.msra.mxu0 %v316
    %427 = vmatprep.subr.mxu0 %v320
    %428 = vmatpush1.msra.mxu0 %v319
    %429 = vmatprep.subr.mxu0 %v323
    %430 = vmatpush1.msra.mxu0 %v322
    %431 = vmatprep.subr.mxu0 %v326
    %432 = vmatpush1.msra.mxu0 %v325
    %433 = vmatprep.subr.mxu0 %v329
    %434 = vmatpush1.msra.mxu0 %v328
    %435 = vmatprep.subr.mxu0 %v332
    %436 = vmatpush1.msra.mxu0 %v331
    %437 = vmatprep.subr.mxu0 %v335
    %438 = vmatpush1.msra.mxu0 %v334
    %439 = vmatprep.subr.mxu0 %v338
    %440 = vmatpush1.msra.mxu0 %v337
    %441 = vmatprep.subr.mxu0 %v341
    %442 = vmatpush1.msra.mxu0 %v340
    %443 = vmatprep.subr.mxu0 %v344
    %444 = vmatpush1.msra.mxu0 %v343
    %445 = vmatprep.subr.mxu0 %v347
    %446 = vmatpush1.msra.mxu0 %v346
    %447 = vmatprep.subr.mxu0 %v350
    %448 = vmatpush1.msra.mxu0 %v349
    %449 = vmatprep.subr.mxu0 %v353
    %450 = vmatpush1.msra.mxu0 %v352
    %451 = vmatprep.subr.mxu0 %v356
    %452 = vmatpush1.msra.mxu0 %v355
    %453 = vmatprep.subr.mxu0 %v359
    %454 = vmatpush1.msra.mxu0 %v358
    %455 = vmatprep.subr.mxu0 %v362
    %456 = vmatpush1.msra.mxu0 %v361
    %457 = vmatprep.subr.mxu0 %v365
    %458 = vmatpush1.msra.mxu0 %v364
    %459 = vmatprep.subr.mxu0 %v368
    %460 = vmatpush1.msra.mxu0 %v367
    %461 = vmatprep.subr.mxu0 %v371
    %462 = vmatpush1.msra.mxu0 %v370
    %463 = vmatprep.subr.mxu0 %v374
    %464 = vmatpush1.msra.mxu0 %v373
    %465 = vmatprep.subr.mxu0 %v377
    %466 = vmatpush1.msra.mxu0 %v376
    %467 = vmatprep.subr.mxu0 %v380
    %468 = vmatpush1.msra.mxu0 %v379
    %469 = vmatprep.subr.mxu0 %v383
    %470 = vmatpush1.msra.mxu0 %v382
    %471 = vmatprep.subr.mxu0 %v386
    %472 = vmatpush1.msra.mxu0 %v385
    %473 = vmatprep.subr.mxu0 %v389
    %474 = vmatpush1.msra.mxu0 %v388
    %475 = vmatprep.subr.mxu0 %v392
    %476 = vmatpush1.msra.mxu0 %v391
    %477 = vmatprep.subr.mxu0 %v395
    %478 = vmatpush1.msra.mxu0 %v394
    %479 = vmatprep.subr.mxu0 %v398
    %480 = vmatpush1.msra.mxu0 %v397
    %481 = vmatprep.mubr.f32.mxu0 %v303
    %482 = vmatmul.mubr.f32.gmra.mrb[0].mxu0 %v302
    %v483 = vpop.f32.mrb[0].mxu0
    %v484 = vadd.f32 %v405, %v483
    %v485 = vpop.f32.mrb[0].mxu0
    %v486 = vadd.f32 %v409, %v485
    %487 = vdwg.mxu0
    %488 = vmatprep.subr.mxu0 0.0
    %489 = vmatpush1.msra.mxu0 %v306
    %490 = vmatprep.subr.mxu0 0.0
    %491 = vmatpush1.msra.mxu0 %v309
    %492 = vmatprep.subr.mxu0 0.0
    %493 = vmatpush1.msra.mxu0 %v312
    %494 = vmatprep.subr.mxu0 0.0
    %495 = vmatpush1.msra.mxu0 %v315
    %496 = vmatprep.subr.mxu0 0.0
    %497 = vmatpush1.msra.mxu0 %v318
    %498 = vmatprep.subr.mxu0 0.0
    %499 = vmatpush1.msra.mxu0 %v321
    %500 = vmatprep.subr.mxu0 0.0
    %501 = vmatpush1.msra.mxu0 %v324
    %502 = vmatprep.subr.mxu0 0.0
    %503 = vmatpush1.msra.mxu0 %v327
    %504 = vmatprep.subr.mxu0 0.0
    %505 = vmatpush1.msra.mxu0 %v330
    %506 = vmatprep.subr.mxu0 0.0
    %507 = vmatpush1.msra.mxu0 %v333
    %508 = vmatprep.subr.mxu0 0.0
    %509 = vmatpush1.msra.mxu0 %v336
    %510 = vmatprep.subr.mxu0 0.0
    %511 = vmatpush1.msra.mxu0 %v339
    %512 = vmatprep.subr.mxu0 0.0
    %513 = vmatpush1.msra.mxu0 %v342
    %514 = vmatprep.subr.mxu0 0.0
    %515 = vmatpush1.msra.mxu0 %v345
    %516 = vmatprep.subr.mxu0 0.0
    %517 = vmatpush1.msra.mxu0 %v348
    %518 = vmatprep.subr.mxu0 0.0
    %519 = vmatpush1.msra.mxu0 %v351
    %520 = vmatprep.subr.mxu0 0.0
    %521 = vmatpush1.msra.mxu0 %v354
    %522 = vmatprep.subr.mxu0 0.0
    %523 = vmatpush1.msra.mxu0 %v357
    %524 = vmatprep.subr.mxu0 0.0
    %525 = vmatpush1.msra.mxu0 %v360
    %526 = vmatprep.subr.mxu0 0.0
    %527 = vmatpush1.msra.mxu0 %v363
    %528 = vmatprep.subr.mxu0 0.0
    %529 = vmatpush1.msra.mxu0 %v366
    %530 = vmatprep.subr.mxu0 0.0
    %531 = vmatpush1.msra.mxu0 %v369
    %532 = vmatprep.subr.mxu0 0.0
    %533 = vmatpush1.msra.mxu0 %v372
    %534 = vmatprep.subr.mxu0 0.0
    %535 = vmatpush1.msra.mxu0 %v375
    %536 = vmatprep.subr.mxu0 0.0
    %537 = vmatpush1.msra.mxu0 %v378
    %538 = vmatprep.subr.mxu0 0.0
    %539 = vmatpush1.msra.mxu0 %v381
    %540 = vmatprep.subr.mxu0 0.0
    %541 = vmatpush1.msra.mxu0 %v384
    %542 = vmatprep.subr.mxu0 0.0
    %543 = vmatpush1.msra.mxu0 %v387
    %544 = vmatprep.subr.mxu0 0.0
    %545 = vmatpush1.msra.mxu0 %v390
    %546 = vmatprep.subr.mxu0 0.0
    %547 = vmatpush1.msra.mxu0 %v393
    %548 = vmatprep.subr.mxu0 0.0
    %549 = vmatpush1.msra.mxu0 %v396
    %550 = vmatprep.subr.mxu0 0.0
    %551 = vmatpush1.msra.mxu0 %v399
    %552 = vmatprep.mubr.f32.mxu0 %v303
    %553 = vmatmul.mubr.f32.gmra.mrb[0].mxu0 %v302
    %v554 = vpop.f32.mrb[0].mxu0
    %v555 = vadd.f32 %v413, %v554
    %v556 = vpop.f32.mrb[0].mxu0
    %557 = vdwg.mxu0
    %558 = vst [vmem:[#allocation10] sm:$0xff] %v484
    %559 = vst [vmem:[#allocation10 + $0x8] sm:$0xff] %v486
    %560 = vst [vmem:[#allocation10 + $0x10] sm:$0xff] %v555
    // Predicated region
    $region46: #{tpu_custom_call.1} parent=1 // pred_check
      _
    $region47: #{tpu_custom_call.1} parent=1 // pred_check_branch
      %562 = sbr.rel (0) target = $region49
    $region48: #{tpu_custom_call.1} parent=1 // pred_region
      %s564 = ssub.s32 384, 384
      %565 = vsyncadd [#allocation4], %s564
      %s567 = sshll.u32 [#allocation10], 4
      %s568 = int_to_ptr.vmem [resolvable:$true] %s567
      %570 = dma.vmem_to_hbm [thread:$0]  %s568, 384, %s7, [#allocation4]
    $region49: #{tpu_custom_call.1} parent=1 // pred_fallthru
      _
    // Predicated region
    $region50: #{tpu_custom_call.1} parent=1 // pred_check
      _
    $region51: #{tpu_custom_call.1} parent=1 // pred_check_branch
      %572 = sbr.rel (0) target = $region53
    $region52: #{tpu_custom_call.1} parent=1 // pred_region
      %573 = dma.done [#allocation4], 384
    $region53: #{tpu_custom_call.1} parent=1 // pred_fallthru
      _
    %574 = vsyncpa [#allocation3], 1
    %575 = vsyncpa [#allocation6], 1
    %576 = vsyncpa [#allocation9], 1
    %577 = vsyncpa [#allocation4], 1

</llo_original>
